<compile_context>
chip_gen: v6e
topology: v6e:2x2x1
jax: 0.10.0
libtpu: 0.0.40
codegen_flags: <defaults>
</compile_context>

<pallas_src>
import jax
import jax.numpy as jnp
from jax import lax
from jax.experimental import pallas as pl
from jax.experimental.pallas import tpu as pltpu


def bottleneck_kernel(x_ref, halo_ref, w1_ref, w2_ref, w3_ref, bias_ref, o_ref):
    P = w1_ref.shape[0]
    Cout = w3_ref.shape[0]
    TL = x_ref.shape[2]

    b1 = bias_ref[0:P, :]                        # (P, 1)    f32
    b2 = bias_ref[P:2 * P, :]                    # (P, 1)    f32
    b3 = bias_ref[2 * P:2 * P + Cout, :]         # (Cout, 1) f32

    x = x_ref[0]                                 # (Cin, TL) bf16

    # ---- conv1x1 -> bn1 -> relu (bn1 scale folded into w1) ----
    h1 = jnp.dot(w1_ref[...], x, preferred_element_type=jnp.float32) + b1
    h1 = jnp.maximum(h1, 0.0)                    # (P, TL) f32

    # ---- halo columns: h1 values just outside this L tile, precomputed and
    #      boundary-masked (zero at the true sequence ends) in the wrapper ----
    t = pl.program_id(1)
    hh = halo_ref[t]                             # (P, 2) f32  [prev_col, next_col]
    prev_col = hh[:, 0:1]
    next_col = hh[:, 1:2]

    # ---- conv3x1 (stride 1, pad 1) -> bn2 -> relu, as ONE K=3P matmul ----
    lane = lax.broadcasted_iota(jnp.int32, (P, TL), 1)
    h_prev = jnp.where(lane == 0, prev_col, pltpu.roll(h1, 1, axis=1))            # h1[l-1]
    h_next = jnp.where(lane == TL - 1, next_col, pltpu.roll(h1, TL - 1, axis=1))  # h1[l+1]
    h_cat = jnp.concatenate([h_prev, h1, h_next], axis=0).astype(jnp.bfloat16)    # (3P, TL)
    h2 = jnp.dot(w2_ref[...], h_cat, preferred_element_type=jnp.float32) + b2
    h2 = jnp.maximum(h2, 0.0).astype(jnp.bfloat16)             # (P, TL)

    # ---- conv1x1 -> bn3 -> residual add -> relu; bf16 writeback ----
    h3 = jnp.dot(w3_ref[...], h2, preferred_element_type=jnp.float32) + b3
    o_ref[0] = jnp.maximum(h3 + x.astype(jnp.float32), 0.0).astype(jnp.bfloat16)


def _vmem_limit_bytes():
    """Generation-aware scoped-VMEM limit, with headroom under physical VMEM."""
    try:
        phys = int(pltpu.get_tpu_info().vmem_capacity_bytes)
    except Exception:
        phys = 0
    if phys < (16 << 20):
        phys = 64 << 20                    # conservative fallback = v7x physical VMEM
    # v5e/v6e (128 MiB physical) -> 96 MiB; v7x (64 MiB physical) -> 48 MiB.
    return int(min(96 << 20, phys * 3 // 4))


def _pick_tile_l(L, cin, p, cout, budget_bytes):
    """Largest L tile (multiple of 128, dividing L) fitting a VMEM budget."""
    if L % 128 != 0:
        # TODO(synk): no VMEM check on the non-128-multiple fallback.
        return L
    nt_max = pl.cdiv(L, 128)
    # TL-independent bytes: double-buffered bf16 weights, f32 biases, and the
    # per-batch f32 halo block (worst-case nt).
    fixed = (2 * 2 * (p * cin + 3 * p * p + cout * p)      # w1 / w2cat / w3, 2 bufs
             + 2 * 4 * (2 * p + cout)                      # packed biases, 2 bufs
             + 2 * 4 * (nt_max * p * 2))                   # halo block, 2 bufs
    # Per-L-column bytes: x (bf16 x2 bufs) + out (bf16 x2 bufs) + all
    # simultaneously-live in-kernel temporaries.
    per_col = (2 * 2 * cin              # x tile (bf16, 2 bufs)
               + 2 * 2 * cout           # out tile (bf16, 2 bufs)
               + 4 * 4 * p              # h1, h_prev, h_next, iota (f32)
               + 2 * 3 * p + 2 * p      # h_cat (3P) + h2 (P), bf16
               + 4 * cout + 4 * cin)    # h3 f32 + x upcast for residual
    tl = (budget_bytes - fixed) // max(per_col, 1)
    tl = int(max(128, min(L, (tl // 128) * 128)))
    while L % tl != 0 and tl > 128:
        tl -= 128
    if L % tl != 0:
        tl = L
    return tl


def _compute_halo(xb, w1, b1, tile_l, nt):
    """Post-conv1 halo columns for the 3-tap conv, boundary-masked.

    Returns (N, nt, P, 2) f32: for tile t, column 0 is h1[:, t*TL-1] and
    column 1 is h1[:, (t+1)*TL], with zeros outside [0, L) (matching the
    zero-padding conv2 applies to conv1's output).
    """
    N, Cin, L = xb.shape
    P = w1.shape[0]
    w1f = w1.astype(jnp.float32)
    if nt > 1:
        xprev = xb[:, :, tile_l - 1:L - 1:tile_l].astype(jnp.float32)   # (N, Cin, nt-1)
        xnext = xb[:, :, tile_l:L:tile_l].astype(jnp.float32)           # (N, Cin, nt-1)
        hprev = jax.nn.relu(jnp.einsum('pc,ncm->npm', w1f, xprev) + b1[None, :, None])
        hnext = jax.nn.relu(jnp.einsum('pc,ncm->npm', w1f, xnext) + b1[None, :, None])
        zero = jnp.zeros((N, P, 1), jnp.float32)
        hprev = jnp.concatenate([zero, hprev], axis=2)                  # (N, P, nt)
        hnext = jnp.concatenate([hnext, zero], axis=2)                  # (N, P, nt)
    else:
        hprev = jnp.zeros((N, P, 1), jnp.float32)
        hnext = jnp.zeros((N, P, 1), jnp.float32)
    halo = jnp.stack([hprev, hnext], axis=-1)                           # (N, P, nt, 2)
    return jnp.transpose(halo, (0, 2, 1, 3))                            # (N, nt, P, 2)


def bottleneck_forward(x_ncl, kernel_params, tile_l=None):
    """x_ncl: (N, Cin, L) float32, PyTorch NCL layout (kept end-to-end). Returns bf16."""
    w1, w2cat, w3, bias = kernel_params
    N, Cin, L = x_ncl.shape
    P = w1.shape[0]
    Cout = w3.shape[0]
    assert Cout == Cin, "residual add requires inplanes == planes*expansion"

    vmem_limit = _vmem_limit_bytes()
    if tile_l is None:
        # ~40% headroom below the scoped limit for pipeline buffers / spills.
        tile_l = _pick_tile_l(L, Cin, P, Cout, budget_bytes=int(vmem_limit * 0.6))
    assert L % tile_l == 0 and (tile_l == L or tile_l % 128 == 0)
    nt = L // tile_l
    # NOTE(v7x): both grid axes are "parallel"; ensure N * nt >= 2 so both
    # TensorCores get work (shrink tile_l if N == 1 and nt == 1).

    xb = x_ncl.astype(jnp.bfloat16)
    halo = _compute_halo(xb, w1, bias[0:P, 0], tile_l, nt)       # (N, nt, P, 2) f32

    return pl.pallas_call(
        bottleneck_kernel,
        out_shape=jax.ShapeDtypeStruct((N, Cout, L), jnp.bfloat16),
        grid=(N, nt),
        in_specs=[
            pl.BlockSpec((1, Cin, tile_l), lambda b, t: (b, 0, t)),    # x tile
            pl.BlockSpec((None, nt, P, 2), lambda b, t: (b, 0, 0, 0)), # halo (per batch)
            pl.BlockSpec((P, Cin), lambda b, t: (0, 0)),               # w1 (bn1-scaled)
            pl.BlockSpec((P, 3 * P), lambda b, t: (0, 0)),             # w2 taps (bn2-scaled)
            pl.BlockSpec((Cout, P), lambda b, t: (0, 0)),              # w3 (bn3-scaled)
            pl.BlockSpec((2 * P + Cout, 1), lambda b, t: (0, 0)),      # packed biases
        ],
        out_specs=pl.BlockSpec((1, Cout, tile_l), lambda b, t: (b, 0, t)),
        compiler_params=pltpu.CompilerParams(
            dimension_semantics=("parallel", "parallel"),
            vmem_limit_bytes=vmem_limit),
    )(xb, halo, w1, w2cat, w3, bias)


def make_params(key, inplanes, planes, expansion=4):
    """Deterministic raw parameters matching the PyTorch module's shapes."""
    cout = planes * expansion
    k = jax.random.split(key, 9)
    conv1_w = jax.random.normal(k[0], (planes, inplanes, 1), jnp.float32) * 0.1
    conv2_w = jax.random.normal(k[1], (planes, planes, 3), jnp.float32) * 0.1
    conv3_w = jax.random.normal(k[2], (cout, planes, 1), jnp.float32) * 0.1
    g1 = 1.0 + 0.1 * jax.random.normal(k[3], (planes,), jnp.float32)
    be1 = 0.1 * jax.random.normal(k[4], (planes,), jnp.float32)
    g2 = 1.0 + 0.1 * jax.random.normal(k[5], (planes,), jnp.float32)
    be2 = 0.1 * jax.random.normal(k[6], (planes,), jnp.float32)
    g3 = 1.0 + 0.1 * jax.random.normal(k[7], (cout,), jnp.float32)
    be3 = 0.1 * jax.random.normal(k[8], (cout,), jnp.float32)
    return (conv1_w, conv2_w, conv3_w, g1, be1, g2, be2, g3, be3)


def prepare_kernel_params(raw, eps=1e-5):
    """Fold eval-mode BN (running_mean=0, running_var=1) into bf16 conv weights."""
    conv1_w, conv2_w, conv3_w, g1, be1, g2, be2, g3, be3 = raw
    inv = 1.0 / jnp.sqrt(1.0 + eps)
    s1, s2, s3 = g1 * inv, g2 * inv, g3 * inv
    w1 = (s1[:, None] * conv1_w[:, :, 0]).astype(jnp.bfloat16)              # (P, Cin)
    w2s = s2[:, None, None] * conv2_w                                       # (P, P, 3)
    w2cat = jnp.concatenate([w2s[:, :, 0], w2s[:, :, 1], w2s[:, :, 2]],
                            axis=1).astype(jnp.bfloat16)                    # (P, 3P)
    w3 = (s3[:, None] * conv3_w[:, :, 0]).astype(jnp.bfloat16)              # (Cout, P)
    bias = jnp.concatenate([be1, be2, be3])[:, None].astype(jnp.float32)    # (2P+Cout, 1)
    return (w1, w2cat, w3, bias)


def reference_forward(x_ncl, raw, eps=1e-5):
    """Plain-JAX f32 reference reproducing the PyTorch (eval-mode) forward."""
    conv1_w, conv2_w, conv3_w, g1, be1, g2, be2, g3, be3 = raw

    def conv1d(x, w, pad):
        return lax.conv_general_dilated(
            x, w, window_strides=(1,), padding=[(pad, pad)],
            dimension_numbers=("NCH", "OIH", "NCH"),
            precision=lax.Precision.HIGHEST)

    def bn(x, g, b):
        scale = g / jnp.sqrt(1.0 + eps)
        return x * scale[None, :, None] + b[None, :, None]

    out = jax.nn.relu(bn(conv1d(x_ncl, conv1_w, 0), g1, be1))
    out = jax.nn.relu(bn(conv1d(out, conv2_w, 1), g2, be2))
    out = bn(conv1d(out, conv3_w, 0), g3, be3)
    return jax.nn.relu(out + x_ncl)


if __name__ == "__main__":
    key = jax.random.PRNGKey(0)
    kx, kp = jax.random.split(key)

    planes, expansion = 8, 4
    inplanes = planes * expansion        # 32 — residual add requires Cin == Cout
    N, L = 2, 512
    x = jax.random.normal(kx, (N, inplanes, L), jnp.float32)

    raw = make_params(kp, inplanes, planes, expansion)
    kparams = prepare_kernel_params(raw)
    ref = reference_forward(x, raw)

    # 1) auto-sized L tile (picks the largest tile fitting the VMEM budget,
    #    here a single 512-lane tile -> lane-dense stores, no halo path).
    out_auto = jax.block_until_ready(bottleneck_forward(x, kparams))
    # 2) forced 128-lane tiles to exercise the cross-tile halo path.
    out_tiled = jax.block_until_ready(bottleneck_forward(x, kparams, tile_l=128))

    for out in (out_auto, out_tiled):
        assert out.shape == (N, inplanes, L) and out.dtype == jnp.bfloat16
        of = out.astype(jnp.float32)
        # bf16 MXU operands + bf16 output writeback (f32 accumulation) ->
        # tolerance covers bf16 rounding of x, the BN-folded weights, and the
        # final store relative to the pure-f32 reference.
        assert jnp.allclose(of, ref, atol=5e-2, rtol=5e-2), (
            "mismatch vs reference, max|diff|=%f" % float(jnp.max(jnp.abs(of - ref))))
    print("KERNEL_OK")
</pallas_src>

<mosaic_0001>
module attributes {stable_mosaic.version = 11 : i64} {
  func.func @bottleneck_kernel(%arg0: i32, %arg1: i32, %arg2: memref<1x32x512xbf16, #tpu.memory_space<vmem>>, %arg3: memref<1x1x8x2xf32, #tpu.memory_space<vmem>>, %arg4: memref<8x32xbf16, #tpu.memory_space<vmem>>, %arg5: memref<8x24xbf16, #tpu.memory_space<vmem>>, %arg6: memref<32x8xbf16, #tpu.memory_space<vmem>>, %arg7: memref<48x1xf32, #tpu.memory_space<vmem>>, %arg8: memref<1x32x512xbf16, #tpu.memory_space<vmem>>) attributes {dimension_semantics = [#tpu.dimension_semantics<parallel>, #tpu.dimension_semantics<parallel>], iteration_bounds = array<i64: 2, 1>, scalar_prefetch = 0 : i64, scratch_operands = 0 : i64, tpu.core_type = #tpu.core_type<tc>, window_params = [{transform_indices = @transform_0, window_bounds = array<i64: 1, 32, 512>}, {transform_indices = @transform_1, window_bounds = array<i64: 1, 1, 8, 2>}, {pipeline_mode = #tpu.pipeline_mode<synchronous>, transform_indices = @transform_2, window_bounds = array<i64: 8, 32>}, {pipeline_mode = #tpu.pipeline_mode<synchronous>, transform_indices = @transform_3, window_bounds = array<i64: 8, 24>}, {pipeline_mode = #tpu.pipeline_mode<synchronous>, transform_indices = @transform_4, window_bounds = array<i64: 32, 8>}, {pipeline_mode = #tpu.pipeline_mode<synchronous>, transform_indices = @transform_5, window_bounds = array<i64: 48, 1>}, {transform_indices = @transform_6, window_bounds = array<i64: 1, 32, 512>}]} {
    %c0 = arith.constant 0 : index
    %c0_0 = arith.constant 0 : index
    %0 = vector.load %arg7[%c0, %c0_0] : memref<48x1xf32, #tpu.memory_space<vmem>>, vector<8x1xf32>
    %c8 = arith.constant 8 : index
    %c0_1 = arith.constant 0 : index
    %1 = vector.load %arg7[%c8, %c0_1] : memref<48x1xf32, #tpu.memory_space<vmem>>, vector<8x1xf32>
    %c16 = arith.constant 16 : index
    %c0_2 = arith.constant 0 : index
    %2 = vector.load %arg7[%c16, %c0_2] : memref<48x1xf32, #tpu.memory_space<vmem>>, vector<32x1xf32>
    %c0_3 = arith.constant 0 : index
    %c0_4 = arith.constant 0 : index
    %c0_5 = arith.constant 0 : index
    %3 = vector.load %arg2[%c0_3, %c0_4, %c0_5] : memref<1x32x512xbf16, #tpu.memory_space<vmem>>, vector<1x32x512xbf16>
    %4 = vector.shape_cast %3 : vector<1x32x512xbf16> to vector<32x512xbf16>
    %c0_6 = arith.constant 0 : index
    %c0_7 = arith.constant 0 : index
    %5 = vector.load %arg4[%c0_6, %c0_7] : memref<8x32xbf16, #tpu.memory_space<vmem>>, vector<8x32xbf16>
    %cst = arith.constant dense<0.000000e+00> : vector<8x512xf32>
    %6 = tpu.matmul %5, %4, %cst {dimension_numbers = #tpu.dot_dimension_numbers<[1], [0], [0], [1], [0, 0, 1, 1], [], []>} : vector<8x32xbf16>, vector<32x512xbf16>, vector<8x512xf32> -> vector<8x512xf32>
    %7 = vector.broadcast %0 : vector<8x1xf32> to vector<8x512xf32>
    %8 = arith.addf %6, %7 : vector<8x512xf32>
    %cst_8 = arith.constant 0.000000e+00 : f32
    %9 = vector.broadcast %cst_8 : f32 to vector<8x512xf32>
    %10 = arith.maximumf %8, %9 : vector<8x512xf32>
    %c0_9 = arith.constant 0 : index
    %11 = arith.index_cast %arg1 : i32 to index
    %c0_10 = arith.constant 0 : index
    %c0_11 = arith.constant 0 : index
    %12 = vector.load %arg3[%c0_9, %11, %c0_10, %c0_11] : memref<1x1x8x2xf32, #tpu.memory_space<vmem>>, vector<1x1x8x2xf32>
    %13 = vector.shape_cast %12 : vector<1x1x8x2xf32> to vector<8x2xf32>
    %14 = vector.extract_strided_slice %13 {offsets = [0, 0], sizes = [8, 1], strides = [1, 1]} : vector<8x2xf32> to vector<8x1xf32>
    %15 = vector.extract_strided_slice %13 {offsets = [0, 1], sizes = [8, 1], strides = [1, 1]} : vector<8x2xf32> to vector<8x1xf32>
    %16 = tpu.iota {dimensions = array<i32: 1>} : vector<8x512xi32>
    %c0_i32 = arith.constant 0 : i32
    %17 = vector.broadcast %c0_i32 : i32 to vector<8x512xi32>
    %18 = arith.cmpi eq, %16, %17 : vector<8x512xi32>
    %c1_i32 = arith.constant 1 : i32
    %19 = tpu.dynamic_rotate %10 by %c1_i32 dim 1 : vector<8x512xf32>, i32 -> vector<8x512xf32>
    %20 = vector.shape_cast %14 : vector<8x1xf32> to vector<8x1xf32>
    %21 = vector.broadcast %20 : vector<8x1xf32> to vector<8x512xf32>
    %22 = arith.select %18, %21, %19 : vector<8x512xi1>, vector<8x512xf32>
    %c511_i32 = arith.constant 511 : i32
    %23 = vector.broadcast %c511_i32 : i32 to vector<8x512xi32>
    %24 = arith.cmpi eq, %16, %23 : vector<8x512xi32>
    %c511_i32_12 = arith.constant 511 : i32
    %25 = tpu.dynamic_rotate %10 by %c511_i32_12 dim 1 : vector<8x512xf32>, i32 -> vector<8x512xf32>
    %26 = vector.shape_cast %15 : vector<8x1xf32> to vector<8x1xf32>
    %27 = vector.broadcast %26 : vector<8x1xf32> to vector<8x512xf32>
    %28 = arith.select %24, %27, %25 : vector<8x512xi1>, vector<8x512xf32>
    %29 = tpu.concatenate %22, %10, %28 in 0 : vector<8x512xf32>, vector<8x512xf32>, vector<8x512xf32> -> vector<24x512xf32>
    %30 = arith.truncf %29 : vector<24x512xf32> to vector<24x512xbf16>
    %c0_13 = arith.constant 0 : index
    %c0_14 = arith.constant 0 : index
    %31 = vector.load %arg5[%c0_13, %c0_14] : memref<8x24xbf16, #tpu.memory_space<vmem>>, vector<8x24xbf16>
    %cst_15 = arith.constant dense<0.000000e+00> : vector<8x512xf32>
    %32 = tpu.matmul %31, %30, %cst_15 {dimension_numbers = #tpu.dot_dimension_numbers<[1], [0], [0], [1], [0, 0, 1, 1], [], []>} : vector<8x24xbf16>, vector<24x512xbf16>, vector<8x512xf32> -> vector<8x512xf32>
    %33 = vector.broadcast %1 : vector<8x1xf32> to vector<8x512xf32>
    %34 = arith.addf %32, %33 : vector<8x512xf32>
    %cst_16 = arith.constant 0.000000e+00 : f32
    %35 = vector.broadcast %cst_16 : f32 to vector<8x512xf32>
    %36 = arith.maximumf %34, %35 : vector<8x512xf32>
    %37 = arith.truncf %36 : vector<8x512xf32> to vector<8x512xbf16>
    %c0_17 = arith.constant 0 : index
    %c0_18 = arith.constant 0 : index
    %38 = vector.load %arg6[%c0_17, %c0_18] : memref<32x8xbf16, #tpu.memory_space<vmem>>, vector<32x8xbf16>
    %cst_19 = arith.constant dense<0.000000e+00> : vector<32x512xf32>
    %39 = tpu.matmul %38, %37, %cst_19 {dimension_numbers = #tpu.dot_dimension_numbers<[1], [0], [0], [1], [0, 0, 1, 1], [], []>} : vector<32x8xbf16>, vector<8x512xbf16>, vector<32x512xf32> -> vector<32x512xf32>
    %40 = vector.broadcast %2 : vector<32x1xf32> to vector<32x512xf32>
    %41 = arith.addf %39, %40 : vector<32x512xf32>
    %42 = arith.extf %4 : vector<32x512xbf16> to vector<32x512xf32>
    %43 = arith.addf %41, %42 : vector<32x512xf32>
    %cst_20 = arith.constant 0.000000e+00 : f32
    %44 = vector.broadcast %cst_20 : f32 to vector<32x512xf32>
    %45 = arith.maximumf %43, %44 : vector<32x512xf32>
    %46 = arith.truncf %45 : vector<32x512xf32> to vector<32x512xbf16>
    %c0_21 = arith.constant 0 : index
    %c0_22 = arith.constant 0 : index
    %c0_23 = arith.constant 0 : index
    %47 = vector.load %arg8[%c0_21, %c0_22, %c0_23] : memref<1x32x512xbf16, #tpu.memory_space<vmem>>, vector<1x32x512xbf16>
    %48 = vector.shape_cast %47 : vector<1x32x512xbf16> to vector<32x512xbf16>
    %49 = vector.shape_cast %46 : vector<32x512xbf16> to vector<1x32x512xbf16>
    tpu.vector_store %arg8[%c0_21, %c0_22, %c0_23], %49 {strides = array<i32>} : memref<1x32x512xbf16, #tpu.memory_space<vmem>>, vector<1x32x512xbf16>,
    return
  }
  func.func @transform_0(%arg0: i32, %arg1: i32) -> (i32, i32, i32) {
    %c0_i32 = arith.constant 0 : i32
    %c0_i32_0 = arith.constant 0 : i32
    return %arg0, %c0_i32, %arg1 : i32, i32, i32
  }
  func.func @transform_1(%arg0: i32, %arg1: i32) -> (i32, i32, i32, i32) {
    %c0_i32 = arith.constant 0 : i32
    %c0_i32_0 = arith.constant 0 : i32
    %c0_i32_1 = arith.constant 0 : i32
    %c0_i32_2 = arith.constant 0 : i32
    return %arg0, %c0_i32, %c0_i32_0, %c0_i32_1 : i32, i32, i32, i32
  }
  func.func @transform_2(%arg0: i32, %arg1: i32) -> (i32, i32) {
    %c0_i32 = arith.constant 0 : i32
    %c0_i32_0 = arith.constant 0 : i32
    %c0_i32_1 = arith.constant 0 : i32
    return %c0_i32, %c0_i32_0 : i32, i32
  }
  func.func @transform_3(%arg0: i32, %arg1: i32) -> (i32, i32) {
    %c0_i32 = arith.constant 0 : i32
    %c0_i32_0 = arith.constant 0 : i32
    %c0_i32_1 = arith.constant 0 : i32
    return %c0_i32, %c0_i32_0 : i32, i32
  }
  func.func @transform_4(%arg0: i32, %arg1: i32) -> (i32, i32) {
    %c0_i32 = arith.constant 0 : i32
    %c0_i32_0 = arith.constant 0 : i32
    %c0_i32_1 = arith.constant 0 : i32
    return %c0_i32, %c0_i32_0 : i32, i32
  }
  func.func @transform_5(%arg0: i32, %arg1: i32) -> (i32, i32) {
    %c0_i32 = arith.constant 0 : i32
    %c0_i32_0 = arith.constant 0 : i32
    %c0_i32_1 = arith.constant 0 : i32
    return %c0_i32, %c0_i32_0 : i32, i32
  }
  func.func @transform_6(%arg0: i32, %arg1: i32) -> (i32, i32, i32) {
    %c0_i32 = arith.constant 0 : i32
    %c0_i32_0 = arith.constant 0 : i32
    return %arg0, %c0_i32, %arg1 : i32, i32, i32
  }
}

</mosaic_0001>

<llo_original>
// kernel: tpu_custom_call.1
$region0: #{tpu_custom_call.1}
  #allocation0 [shape = 'u32[]', space=smem, size = 0x4, offset = 0x4, fixed_abs, tag = 'smem constant byte address 0x4 - core index']
  #allocation1 [shape = 'u32[144,128]{1,0:T(1,128)}', space=vmem, size = 0x12000, scoped, tag = 'internal scratch']
  %s0 = inlined_call_operand.hbm [shape: bf16[2,32,512], index: 0, kind: input, shape index: {}]
  %s1 = inlined_call_operand.vmem [shape: f32[2,1,8,2], index: 1, kind: input, shape index: {}]
  %s2 = inlined_call_operand.vmem [shape: bf16[8,32], index: 2, kind: input, shape index: {}]
  %s3 = inlined_call_operand.vmem [shape: bf16[8,24], index: 3, kind: input, shape index: {}]
  %s4 = inlined_call_operand.vmem [shape: bf16[32,8], index: 4, kind: input, shape index: {}]
  %s5 = inlined_call_operand.vmem [shape: f32[48,1], index: 5, kind: input, shape index: {}]
  %s6 = inlined_call_operand.hbm [shape: bf16[2,32,512], index: 6, kind: output, shape index: {}]
  %s7 = sld [smem:[#allocation0]]
  $region61: #{tpu_custom_call.1} parent=0
    _
  %s9 = ssub.s32 1, %s7
  %s10 = scalar_select 0, %s9, %s7
  $region1: #{tpu_custom_call.1} parent=0
    #allocation2 [shape = 'u8[65536]{0}', space=vmem, size = 0x10000, scoped, tag = 'input window, operand 0']
    #allocation3 [shape = 's32[2]{0}', space=sflag, size = 0x8, scoped, tag = 'scoped memory for tpu_custom_call.1']
    #allocation4 [shape = 's32[2]{0}', space=sflag, size = 0x8, scoped, tag = 'scoped memory for tpu_custom_call.1']
    #allocation5 [shape = 'u8[65536]{0}', space=vmem, size = 0x10000, scoped, tag = 'output window, operand 0']
    %11 = vsyncpa [#allocation3], 0
    %s12 = scalar_lea.sflag [#allocation3], 1
    %13 = vsyncpa %s12, 0
    %14 = vsyncpa [#allocation4], 0
    %s15 = scalar_lea.sflag [#allocation4], 1
    %16 = vsyncpa %s15, 0
    loop: start=0, step=1, limit=4
    $region2: #{tpu_custom_call.1} parent=1 // loop_pre_header
      _
    $region3: #{tpu_custom_call.1} parent=1 // loop_header
      %s18 = sphi 0, %s22
      %p19 = scmp.ge.s32.totalorder %s18, 4
      %s25 = sphi 0, %s37
      %s26 = sphi 0, %s33
      %s27 = sphi 0, %s25
      %s28 = sphi 0, %s26
      %s29 = sphi 0, %s27
      %s30 = sphi 0, %s28
      %s42 = sphi 0, %s44
      %s45 = sphi 0, %s42
      %s46 = sphi 0, %s45
      %s62 = sphi 0, %s46
      %s68 = sphi 0, %s70
      %s71 = sphi 0, %s68
      %s72 = sphi 0, %s71
      %s88 = sphi 0, %s72
      %s92 = sphi 0, %s92
      %s94 = sphi 0, %s92
      %s95 = sphi 0, %s94
      %s109 = sphi 0, %s95
      %s113 = sphi 0, %s113
      %s115 = sphi 0, %s113
      %s116 = sphi 0, %s115
      %s130 = sphi 0, %s116
      %s134 = sphi 0, %s134
      %s136 = sphi 0, %s134
      %s137 = sphi 0, %s136
      %s151 = sphi 0, %s137
      %s155 = sphi 0, %s155
      %s157 = sphi 0, %s155
      %s158 = sphi 0, %s157
      %s172 = sphi 0, %s158
      %s180 = sphi 0, %s182
      %s183 = sphi 0, %s180
      %s184 = sphi 0, %s183
      %s200 = sphi 0, %s184
    $region4: #{tpu_custom_call.1} parent=1 // loop_header_branch
      %21 = sbr.rel (%p19) target = $region8
    $region5: #{tpu_custom_call.1} parent=1 // loop_body
      %s23 = ssub.s32 %s18, 1
      %s24 = ssub.s32 %s18, 2
      %s31 = sadd.s32 1, %s26
      %p32 = scmp.ge.s32.totalorder %s31, 1
      %s33 = scalar_select %p32, 0, %s31
      %s34 = sadd.s32 1, %s25
      %s35 = scalar_select %p32, %s34, %s25
      %p36 = scmp.ge.s32.totalorder %s35, 2
      %s37 = scalar_select %p36, 0, %s35
      %s38 = ssub.s32 %s25, %s37
      %s39 = ssub.s32 %s26, %s33
      %s40 = sor.u32 %s38, %s39
      %p41 = scmp.eq.s32.totalorder %s40, 0
      %s43 = sadd.s32 %s42, 1
      %s44 = scalar_select %p41, %s42, %s43
      %p47 = pneg %p41
      %p48 = scmp.eq.s32.totalorder %s18, 1
      %p49 = por %p47, %p48
      %p50 = scmp.ne.s32.totalorder %s42, %s45
      %p51 = scmp.eq.s32.totalorder %s18, 0
      %p52 = por %p50, %p51
      %p53 = scmp.ne.s32.totalorder %s42, %s45
      %p54 = scmp.eq.s32.totalorder %s23, 1
      %p55 = por %p53, %p54
      %p56 = scmp.ne.s32.totalorder %s45, %s46
      %p57 = scmp.eq.s32.totalorder %s23, 0
      %p58 = por %p56, %p57
      %p59 = scmp.ne.s32.totalorder %s45, %s46
      %p60 = scmp.eq.s32.totalorder %s24, 1
      %p61 = por %p59, %p60
      %p63 = scmp.ne.s32.totalorder %s46, %s62
      %p64 = scmp.eq.s32.totalorder %s24, 0
      %p65 = por %p63, %p64
      %s66 = ssub.s32 %s25, %s37
      %p67 = scmp.eq.s32.totalorder %s66, 0
      %s69 = sadd.s32 %s68, 1
      %s70 = scalar_select %p67, %s68, %s69
      %p73 = pneg %p67
      %p74 = scmp.eq.s32.totalorder %s18, 1
      %p75 = por %p73, %p74
      %p76 = scmp.ne.s32.totalorder %s68, %s71
      %p77 = scmp.eq.s32.totalorder %s18, 0
      %p78 = por %p76, %p77
      %p79 = scmp.ne.s32.totalorder %s68, %s71
      %p80 = scmp.eq.s32.totalorder %s23, 1
      %p81 = por %p79, %p80
      %p82 = scmp.ne.s32.totalorder %s71, %s72
      %p83 = scmp.eq.s32.totalorder %s23, 0
      %p84 = por %p82, %p83
      %p85 = scmp.ne.s32.totalorder %s71, %s72
      %p86 = scmp.eq.s32.totalorder %s24, 1
      %p87 = por %p85, %p86
      %p89 = scmp.ne.s32.totalorder %s72, %s88
      %p90 = scmp.eq.s32.totalorder %s24, 0
      %p91 = por %p89, %p90
      %s93 = sadd.s32 %s92, 1
      %p96 = scmp.eq.s32.totalorder %s18, 1
      %p97 = scmp.ne.s32.totalorder %s92, %s94
      %p98 = scmp.eq.s32.totalorder %s18, 0
      %p99 = por %p97, %p98
      %p100 = scmp.ne.s32.totalorder %s92, %s94
      %p101 = scmp.eq.s32.totalorder %s23, 1
      %p102 = por %p100, %p101
      %p103 = scmp.ne.s32.totalorder %s94, %s95
      %p104 = scmp.eq.s32.totalorder %s23, 0
      %p105 = por %p103, %p104
      %p106 = scmp.ne.s32.totalorder %s94, %s95
      %p107 = scmp.eq.s32.totalorder %s24, 1
      %p108 = por %p106, %p107
      %p110 = scmp.ne.s32.totalorder %s95, %s109
      %p111 = scmp.eq.s32.totalorder %s24, 0
      %p112 = por %p110, %p111
      %s114 = sadd.s32 %s113, 1
      %p117 = scmp.eq.s32.totalorder %s18, 1
      %p118 = scmp.ne.s32.totalorder %s113, %s115
      %p119 = scmp.eq.s32.totalorder %s18, 0
      %p120 = por %p118, %p119
      %p121 = scmp.ne.s32.totalorder %s113, %s115
      %p122 = scmp.eq.s32.totalorder %s23, 1
      %p123 = por %p121, %p122
      %p124 = scmp.ne.s32.totalorder %s115, %s116
      %p125 = scmp.eq.s32.totalorder %s23, 0
      %p126 = por %p124, %p125
      %p127 = scmp.ne.s32.totalorder %s115, %s116
      %p128 = scmp.eq.s32.totalorder %s24, 1
      %p129 = por %p127, %p128
      %p131 = scmp.ne.s32.totalorder %s116, %s130
      %p132 = scmp.eq.s32.totalorder %s24, 0
      %p133 = por %p131, %p132
      %s135 = sadd.s32 %s134, 1
      %p138 = scmp.eq.s32.totalorder %s18, 1
      %p139 = scmp.ne.s32.totalorder %s134, %s136
      %p140 = scmp.eq.s32.totalorder %s18, 0
      %p141 = por %p139, %p140
      %p142 = scmp.ne.s32.totalorder %s134, %s136
      %p143 = scmp.eq.s32.totalorder %s23, 1
      %p144 = por %p142, %p143
      %p145 = scmp.ne.s32.totalorder %s136, %s137
      %p146 = scmp.eq.s32.totalorder %s23, 0
      %p147 = por %p145, %p146
      %p148 = scmp.ne.s32.totalorder %s136, %s137
      %p149 = scmp.eq.s32.totalorder %s24, 1
      %p150 = por %p148, %p149
      %p152 = scmp.ne.s32.totalorder %s137, %s151
      %p153 = scmp.eq.s32.totalorder %s24, 0
      %p154 = por %p152, %p153
      %s156 = sadd.s32 %s155, 1
      %p159 = scmp.eq.s32.totalorder %s18, 1
      %p160 = scmp.ne.s32.totalorder %s155, %s157
      %p161 = scmp.eq.s32.totalorder %s18, 0
      %p162 = por %p160, %p161
      %p163 = scmp.ne.s32.totalorder %s155, %s157
      %p164 = scmp.eq.s32.totalorder %s23, 1
      %p165 = por %p163, %p164
      %p166 = scmp.ne.s32.totalorder %s157, %s158
      %p167 = scmp.eq.s32.totalorder %s23, 0
      %p168 = por %p166, %p167
      %p169 = scmp.ne.s32.totalorder %s157, %s158
      %p170 = scmp.eq.s32.totalorder %s24, 1
      %p171 = por %p169, %p170
      %p173 = scmp.ne.s32.totalorder %s158, %s172
      %p174 = scmp.eq.s32.totalorder %s24, 0
      %p175 = por %p173, %p174
      %s176 = ssub.s32 %s25, %s37
      %s177 = ssub.s32 %s26, %s33
      %s178 = sor.u32 %s176, %s177
      %p179 = scmp.eq.s32.totalorder %s178, 0
      %s181 = sadd.s32 %s180, 1
      %s182 = scalar_select %p179, %s180, %s181
      %p185 = pneg %p179
      %p186 = scmp.eq.s32.totalorder %s18, 1
      %p187 = por %p185, %p186
      %p188 = scmp.ne.s32.totalorder %s180, %s183
      %p189 = scmp.eq.s32.totalorder %s18, 0
      %p190 = por %p188, %p189
      %p191 = scmp.ne.s32.totalorder %s180, %s183
      %p192 = scmp.eq.s32.totalorder %s23, 1
      %p193 = por %p191, %p192
      %p194 = scmp.ne.s32.totalorder %s183, %s184
      %p195 = scmp.eq.s32.totalorder %s23, 0
      %p196 = por %p194, %p195
      %p197 = scmp.ne.s32.totalorder %s183, %s184
      %p198 = scmp.eq.s32.totalorder %s24, 1
      %p199 = por %p197, %p198
      %p201 = scmp.ne.s32.totalorder %s184, %s200
      %p202 = scmp.eq.s32.totalorder %s24, 0
      %p203 = por %p201, %p202
      %p204 = scmp.le.s32.totalorder 1, %s18
      %p205 = scmp.lt.s32.totalorder %s18, 3
      %p206 = pnand %p204, %p205
      %p207 = pneg %p206
      // Predicated region
      $region9: #{tpu_custom_call.1} parent=5 // pred_check
        _
      $region10: #{tpu_custom_call.1} parent=5 // pred_check_branch
        %209 = sbr.rel (%p206) target = $region12
      $region11: #{tpu_custom_call.1} parent=5 // pred_region
        %s210 = ssub.s32 %s18, 1
        // Predicated region
        $region13: #{tpu_custom_call.1} parent=11 // pred_check
          %p211 = pneg %p105
        $region14: #{tpu_custom_call.1} parent=11 // pred_check_branch
          %213 = sbr.rel (%p211) target = $region16
        $region15: #{tpu_custom_call.1} parent=11 // pred_region
          _
        $region16: #{tpu_custom_call.1} parent=11 // pred_fallthru
          _
        // Predicated region
        $region17: #{tpu_custom_call.1} parent=11 // pred_check
          %p214 = pneg %p126
        $region18: #{tpu_custom_call.1} parent=11 // pred_check_branch
          %216 = sbr.rel (%p214) target = $region20
        $region19: #{tpu_custom_call.1} parent=11 // pred_region
          _
        $region20: #{tpu_custom_call.1} parent=11 // pred_fallthru
          _
        // Predicated region
        $region21: #{tpu_custom_call.1} parent=11 // pred_check
          %p217 = pneg %p147
        $region22: #{tpu_custom_call.1} parent=11 // pred_check_branch
          %219 = sbr.rel (%p217) target = $region24
        $region23: #{tpu_custom_call.1} parent=11 // pred_region
          _
        $region24: #{tpu_custom_call.1} parent=11 // pred_fallthru
          _
        // Predicated region
        $region25: #{tpu_custom_call.1} parent=11 // pred_check
          %p220 = pneg %p168
        $region26: #{tpu_custom_call.1} parent=11 // pred_check_branch
          %222 = sbr.rel (%p220) target = $region28
        $region27: #{tpu_custom_call.1} parent=11 // pred_region
          _
        $region28: #{tpu_custom_call.1} parent=11 // pred_fallthru
          _
      $region12: #{tpu_custom_call.1} parent=5 // pred_fallthru
        _
      %p223 = scmp.lt.s32.totalorder %s18, 2
      // Predicated region
      $region29: #{tpu_custom_call.1} parent=5 // pred_check
        %p224 = pneg %p223
      $region30: #{tpu_custom_call.1} parent=5 // pred_check_branch
        %226 = sbr.rel (%p224) target = $region32
      $region31: #{tpu_custom_call.1} parent=5 // pred_region
        // Predicated region
        $region33: #{tpu_custom_call.1} parent=31 // pred_check
          %p227 = pneg %p52
        $region34: #{tpu_custom_call.1} parent=31 // pred_check_branch
          %229 = sbr.rel (%p227) target = $region36
        $region35: #{tpu_custom_call.1} parent=31 // pred_region
          %s230 = sand.u32 %s42, 1
          %s231 = scalar_lea.sflag [#allocation3], %s230
          %s232 = sand.u32 %s42, 1
          %s233 = smul.addr %s232, 64
          %s234 = scalar_lea.vmem [#allocation2], %s233
          %s235 = smul.u32 4, %s26
          %s237 = ssub.s32 1024, 1024
          %238 = vsyncadd %s231, %s237
          %s239 = smul.addr %s25, 16
          %s240 = sadd.s32 %s235, %s239
          %s241 = smul.addr %s240, 64
          %s242 = scalar_lea.hbm %s0, %s241
          %s243 = sshll.u32 %s234, 4
          %s244 = int_to_ptr.vmem [resolvable:$true] %s243
          %249 = dma.hbm_to_vmem [thread:$0]  %s242, 1024, %s244, %s231, 256, 256, 16
        $region36: #{tpu_custom_call.1} parent=31 // pred_fallthru
          _
        // Predicated region
        $region37: #{tpu_custom_call.1} parent=31 // pred_check
          %p250 = pneg %p78
        $region38: #{tpu_custom_call.1} parent=31 // pred_check_branch
          %252 = sbr.rel (%p250) target = $region40
        $region39: #{tpu_custom_call.1} parent=31 // pred_region
          %p253 = scmp.lt.s32.totalorder %s25, 1
          %s254 = scalar_select %p253, %s25, 1
          %s255 = smul.addr %s254, 8
          %s256 = scalar_lea.vmem %s1, %s255
        $region40: #{tpu_custom_call.1} parent=31 // pred_fallthru
          _
      $region32: #{tpu_custom_call.1} parent=5 // pred_fallthru
        _
      %p257 = scmp.le.s32.totalorder 1, %s18
      %p258 = scmp.lt.s32.totalorder %s18, 3
      %p259 = pnand %p257, %p258
      %p260 = pneg %p259
      // Predicated region
      $region41: #{tpu_custom_call.1} parent=5 // pred_check
        _
      $region42: #{tpu_custom_call.1} parent=5 // pred_check_branch
        %262 = sbr.rel (%p259) target = $region44
      $region43: #{tpu_custom_call.1} parent=5 // pred_region
        %s263 = ssub.s32 %s18, 1
        %s264 = sand.u32 %s45, 1
        %s265 = scalar_lea.sflag [#allocation3], %s264
        %s266 = sand.u32 %s45, 1
        %s267 = smul.addr %s266, 64
        %s268 = scalar_lea.vmem [#allocation2], %s267
        // Predicated region
        $region45: #{tpu_custom_call.1} parent=43 // pred_check
          %p269 = pneg %p58
        $region46: #{tpu_custom_call.1} parent=43 // pred_check_branch
          %271 = sbr.rel (%p269) target = $region48
        $region47: #{tpu_custom_call.1} parent=43 // pred_region
          %272 = dma.done %s265, 1024
        $region48: #{tpu_custom_call.1} parent=43 // pred_fallthru
          _
        %s273 = sand.u32 %s45, 1
        %s274 = scalar_lea.sflag [#allocation3], %s273
        %s275 = sand.u32 %s45, 1
        %s276 = smul.addr %s275, 64
        %s277 = scalar_lea.vmem [#allocation2], %s276
        %p278 = pneg %p58
        %p279 = pneg %p55
        %p280 = scmp.lt.s32.totalorder %s27, 1
        %s281 = scalar_select %p280, %s27, 1
        %s282 = smul.addr %s281, 8
        %s283 = scalar_lea.vmem %s1, %s282
        %p284 = pneg %p84
        %p285 = pneg %p81
        %p286 = pneg %p105
        %p287 = pneg %p102
        %p288 = pneg %p126
        %p289 = pneg %p123
        %p290 = pneg %p147
        %p291 = pneg %p144
        %p292 = pneg %p168
        %p293 = pneg %p165
        %p294 = pneg %p196
        %p295 = pneg %p193
        %s296 = sand.u32 %s183, 1
        %s297 = scalar_lea.sflag [#allocation4], %s296
        %s298 = sand.u32 %s183, 1
        %s299 = smul.addr %s298, 64
        %s300 = scalar_lea.vmem [#allocation5], %s299
        %s301 = smul.u32 4, %s28
        %p302 = scmp.lt.s32.totalorder %s27, 1
        %s303 = scalar_select %p302, %s27, 1
        %s304 = smul.addr %s303, 8
        %s305 = scalar_lea.vmem %s1, %s304
        %s306 = smul.u32 4, %s28
        %v308 = vld [vmem:[%s5] sm:$0xff]
        %v309 = vld [vmem:[%s5 + $0x8] sm:$0xff]
        %v310 = vld [vmem:[%s5 + $0x10] sm:$0xff]
        %v311 = vld [vmem:[%s5 + $0x18] sm:$0xff]
        %v312 = vld [vmem:[%s5 + $0x20] sm:$0xff]
        %v313 = vld [vmem:[%s5 + $0x28] sm:$0xff]
        %v314 = vld [vmem:[%s268] sm:$0xff]
        %v315 = vld [vmem:[%s268 + $0x8] sm:$0xff]
        %v316 = vld [vmem:[%s268 + $0x10] sm:$0xff]
        %v317 = vld [vmem:[%s268 + $0x18] sm:$0xff]
        %v318 = vld [vmem:[%s268 + $0x20] sm:$0xff]
        %v319 = vld [vmem:[%s268 + $0x28] sm:$0xff]
        %v320 = vld [vmem:[%s268 + $0x30] sm:$0xff]
        %v321 = vld [vmem:[%s268 + $0x38] sm:$0xff]
        %v322 = vld [vmem:[%s2] sm:$0xf]
        %324 = vset.pattern.permute.xlu0 0
        %325 = vperm.xlu0 %324, %v308
        %v326 = vpop.permute.xlu0 %325
        %v336 = vunpack.c.l.b16 %v314
        %v337 = vunpack.c.h.b16 %v314
        %v338 = vunpack.c.l.b16 %v315
        %v339 = vunpack.c.h.b16 %v315
        %v340 = vunpack.c.l.b16 %v316
        %v341 = vunpack.c.h.b16 %v316
        %v342 = vunpack.c.l.b16 %v317
        %v343 = vunpack.c.h.b16 %v317
        %v344 = vunpack.c.l.b16 %v318
        %v345 = vunpack.c.h.b16 %v318
        %v346 = vunpack.c.l.b16 %v319
        %v347 = vunpack.c.h.b16 %v319
        %v348 = vunpack.c.l.b16 %v320
        %v349 = vunpack.c.h.b16 %v320
        %v350 = vunpack.c.l.b16 %v321
        %v351 = vunpack.c.h.b16 %v321
        %v352 = vpack.c.b16 %v340, %v336
        %v353 = vpack.c.b16 %v341, %v337
        %v354 = vpack.c.b16 %v342, %v338
        %v355 = vpack.c.b16 %v343, %v339
        %v356 = vpack.c.b16 %v348, %v344
        %v357 = vpack.c.b16 %v349, %v345
        %v358 = vpack.c.b16 %v350, %v346
        %v359 = vpack.c.b16 %v351, %v347
        %vm368 = vcmask 261120
        %v370 = vsel %vm368, %v322, 0
        %372 = vmatprep.subr.bf16.mxu0 0
        %373 = vmatpush1.bf16.msra.mxu0 0
        %374 = vmatprep.subr.bf16.mxu0 0
        %375 = vmatpush1.bf16.msra.mxu0 0
        %376 = vmatprep.subr.bf16.mxu0 0
        %377 = vmatpush1.bf16.msra.mxu0 0
        %378 = vmatprep.subr.bf16.mxu0 0
        %379 = vmatpush1.bf16.msra.mxu0 0
        %380 = vmatprep.subr.bf16.mxu0 0
        %381 = vmatpush1.bf16.msra.mxu0 0
        %382 = vmatprep.subr.bf16.mxu0 0
        %383 = vmatpush1.bf16.msra.mxu0 0
        %384 = vmatprep.subr.bf16.mxu0 %v357
        %385 = vmatpush1.bf16.msra.mxu0 %v356
        %386 = vmatprep.subr.bf16.mxu0 %v353
        %387 = vmatpush1.bf16.msra.mxu0 %v352
        %388 = vmatprep.subr.bf16.mxu0 0
        %389 = vmatpush2.bf16.msra.mxu0 0
        %390 = vmatprep.subr.bf16.mxu0 0
        %391 = vmatpush2.bf16.msra.mxu0 0
        %392 = vmatprep.subr.bf16.mxu0 0
        %393 = vmatpush2.bf16.msra.mxu0 0
        %394 = vmatprep.subr.bf16.mxu0 0
        %395 = vmatpush2.bf16.msra.mxu0 0
        %396 = vmatprep.subr.bf16.mxu0 0
        %397 = vmatpush2.bf16.msra.mxu0 0
        %398 = vmatprep.subr.bf16.mxu0 0
        %399 = vmatpush2.bf16.msra.mxu0 0
        %400 = vmatprep.subr.bf16.mxu0 0
        %401 = vmatpush2.bf16.msra.mxu0 0
        %402 = vmatprep.subr.bf16.mxu0 0
        %403 = vmatpush2.bf16.msra.mxu0 0
        %404 = vmatprep.mubr.bf16.mxu0 0
        %405 = vmatmul.mubr.bf16.gmra.mxu0 %v370
        %v406 = vpop.f32.mrf.mxu0
        %v407 = vadd.f32 %v326, %v406
        %v408 = vpop.f32.mrf.mxu0
        %v409 = vadd.f32 %v326, %v408
        %v410 = vpop.f32.mrf.mxu0
        %v411 = vpop.f32.mrf.mxu0
        %412 = vdwg.mxu0
        %413 = vmatprep.subr.bf16.mxu0 0
        %414 = vmatpush1.bf16.msra.mxu0 0
        %415 = vmatprep.subr.bf16.mxu0 0
        %416 = vmatpush1.bf16.msra.mxu0 0
        %417 = vmatprep.subr.bf16.mxu0 0
        %418 = vmatpush1.bf16.msra.mxu0 0
        %419 = vmatprep.subr.bf16.mxu0 0
        %420 = vmatpush1.bf16.msra.mxu0 0
        %421 = vmatprep.subr.bf16.mxu0 0
        %422 = vmatpush1.bf16.msra.mxu0 0
        %423 = vmatprep.subr.bf16.mxu0 0
        %424 = vmatpush1.bf16.msra.mxu0 0
        %425 = vmatprep.subr.bf16.mxu0 %v359
        %426 = vmatpush1.bf16.msra.mxu0 %v358
        %427 = vmatprep.subr.bf16.mxu0 %v355
        %428 = vmatpush1.bf16.msra.mxu0 %v354
        %429 = vmatprep.subr.bf16.mxu0 0
        %430 = vmatpush2.bf16.msra.mxu0 0
        %431 = vmatprep.subr.bf16.mxu0 0
        %432 = vmatpush2.bf16.msra.mxu0 0
        %433 = vmatprep.subr.bf16.mxu0 0
        %434 = vmatpush2.bf16.msra.mxu0 0
        %435 = vmatprep.subr.bf16.mxu0 0
        %436 = vmatpush2.bf16.msra.mxu0 0
        %437 = vmatprep.subr.bf16.mxu0 0
        %438 = vmatpush2.bf16.msra.mxu0 0
        %439 = vmatprep.subr.bf16.mxu0 0
        %440 = vmatpush2.bf16.msra.mxu0 0
        %441 = vmatprep.subr.bf16.mxu0 0
        %442 = vmatpush2.bf16.msra.mxu0 0
        %443 = vmatprep.subr.bf16.mxu0 0
        %444 = vmatpush2.bf16.msra.mxu0 0
        %445 = vmatprep.mubr.bf16.mxu0 0
        %446 = vmatmul.mubr.bf16.gmra.mxu0 %v370
        %v447 = vpop.f32.mrf.mxu0
        %v448 = vadd.f32 %v326, %v447
        %v449 = vpop.f32.mrf.mxu0
        %v450 = vadd.f32 %v326, %v449
        %v451 = vpop.f32.mrf.mxu0
        %v452 = vpop.f32.mrf.mxu0
        %453 = vdwg.mxu0
        %v454 = vmax.f32 %v407, 0.0
        %v455 = vmax.f32 %v409, 0.0
        %v456 = vmax.f32 %v448, 0.0
        %v457 = vmax.f32 %v450, 0.0
        %s458 = smul.u32 %s28, 8
        %s459 = scalar_lea.vmem %s305, %s458
        %v460 = vld [vmem:[%s459] sm:$0xff]
        %v461 = vlaneseq
        %v462 = vand.u32 %v461, 127
        %v463 = vadd.s32 %v462, 128
        %v464 = vadd.s32 %v462, 256
        %v465 = vadd.s32 %v462, 384
        %vm466 = vcmp.eq.s32.totalorder %v462, 0
        %vm467 = vcmp.eq.s32.totalorder %v463, 0
        %vm468 = vcmp.eq.s32.totalorder %v464, 0
        %vm469 = vcmp.eq.s32.totalorder %v465, 0
        %470 = vrot.lane.b32.xlu0 %v454, 1
        %v471 = vpop.permute.xlu0 %470
        %472 = vrot.lane.b32.xlu0 %v455, 1
        %v473 = vpop.permute.xlu0 %472
        %474 = vrot.lane.b32.xlu0 %v456, 1
        %v475 = vpop.permute.xlu0 %474
        %476 = vrot.lane.b32.xlu0 %v457, 1
        %v477 = vpop.permute.xlu0 %476
        %vm478 = vcmp.lt.s32.totalorder %v462, 1
        %v479 = vsel %vm478, %v475, %v477
        %v480 = vsel %vm478, %v473, %v475
        %v481 = vsel %vm478, %v471, %v473
        %v482 = vsel %vm478, %v477, %v471
        %484 = vset.pattern.permute.xlu0 0
        %485 = vperm.xlu0 %484, %v460
        %v486 = vpop.permute.xlu0 %485
        %v488 = vsel %vm466, %v486, %v482
        %v489 = vsel %vm467, %v486, %v481
        %v490 = vsel %vm468, %v486, %v480
        %v491 = vsel %vm469, %v486, %v479
        %vm492 = vcmp.eq.s32.totalorder %v462, 511
        %vm493 = vcmp.eq.s32.totalorder %v463, 511
        %vm494 = vcmp.eq.s32.totalorder %v464, 511
        %vm495 = vcmp.eq.s32.totalorder %v465, 511
        %496 = vrot.lane.b32.xlu0 %v454, 127
        %v497 = vpop.permute.xlu0 %496
        %498 = vrot.lane.b32.xlu0 %v455, 127
        %v499 = vpop.permute.xlu0 %498
        %500 = vrot.lane.b32.xlu0 %v456, 127
        %v501 = vpop.permute.xlu0 %500
        %502 = vrot.lane.b32.xlu0 %v457, 127
        %v503 = vpop.permute.xlu0 %502
        %vm504 = vcmp.lt.s32.totalorder %v462, 127
        %v505 = vsel %vm504, %v501, %v503
        %v506 = vsel %vm504, %v499, %v501
        %v507 = vsel %vm504, %v497, %v499
        %v508 = vsel %vm504, %v503, %v497
        %509 = vset.pattern.permute.xlu0 1
        %510 = vperm.xlu0 %509, %v460
        %v511 = vpop.permute.xlu0 %510
        %v513 = vsel %vm492, %v511, %v507
        %v514 = vsel %vm493, %v511, %v506
        %v515 = vsel %vm494, %v511, %v505
        %v516 = vsel %vm495, %v511, %v508
        %v517 = vpack.c.bf16 %v454, %v488
        %v518 = vpack.c.bf16 %v455, %v489
        %v519 = vpack.c.bf16 %v456, %v490
        %v520 = vpack.c.bf16 %v457, %v491
        %v521 = vpack.c.bf16 %v513, %v513
        %v522 = vpack.c.bf16 %v514, %v514
        %v523 = vpack.c.bf16 %v515, %v515
        %v524 = vpack.c.bf16 %v516, %v516
        %v525 = vld [vmem:[%s3] sm:$0xf]
        %527 = vset.pattern.permute.xlu0 0
        %528 = vperm.xlu0 %527, %v309
        %v529 = vpop.permute.xlu0 %528
        %vm531 = vcmask 195584
        %v533 = vsel %vm531, %v525, 0
        %vm535 = vcmask 1043456
        %v537 = vsel %vm535, %v521, 0
        %v540 = vsel %vm535, %v522, 0
        %v543 = vsel %vm535, %v523, 0
        %v546 = vsel %vm535, %v524, 0
        %548 = vmatprep.subr.bf16.mxu0 0
        %549 = vmatpush1.bf16.msra.mxu0 0
        %550 = vmatprep.subr.bf16.mxu0 0
        %551 = vmatpush1.bf16.msra.mxu0 0
        %552 = vmatprep.subr.bf16.mxu0 0
        %553 = vmatpush1.bf16.msra.mxu0 0
        %554 = vmatprep.subr.bf16.mxu0 0
        %555 = vmatpush1.bf16.msra.mxu0 0
        %556 = vmatprep.subr.bf16.mxu0 0
        %557 = vmatpush1.bf16.msra.mxu0 0
        %558 = vmatprep.subr.bf16.mxu0 0
        %559 = vmatpush1.bf16.msra.mxu0 0
        %560 = vmatprep.subr.bf16.mxu0 %v540
        %561 = vmatpush1.bf16.msra.mxu0 %v537
        %562 = vmatprep.subr.bf16.mxu0 %v518
        %563 = vmatpush1.bf16.msra.mxu0 %v517
        %564 = vmatprep.subr.bf16.mxu0 0
        %565 = vmatpush2.bf16.msra.mxu0 0
        %566 = vmatprep.subr.bf16.mxu0 0
        %567 = vmatpush2.bf16.msra.mxu0 0
        %568 = vmatprep.subr.bf16.mxu0 0
        %569 = vmatpush2.bf16.msra.mxu0 0
        %570 = vmatprep.subr.bf16.mxu0 0
        %571 = vmatpush2.bf16.msra.mxu0 0
        %572 = vmatprep.subr.bf16.mxu0 0
        %573 = vmatpush2.bf16.msra.mxu0 0
        %574 = vmatprep.subr.bf16.mxu0 0
        %575 = vmatpush2.bf16.msra.mxu0 0
        %576 = vmatprep.subr.bf16.mxu0 0
        %577 = vmatpush2.bf16.msra.mxu0 0
        %578 = vmatprep.subr.bf16.mxu0 0
        %579 = vmatpush2.bf16.msra.mxu0 0
        %580 = vmatprep.mubr.bf16.mxu0 0
        %581 = vmatmul.mubr.bf16.gmra.mxu0 %v533
        %v582 = vpop.f32.mrf.mxu0
        %v583 = vadd.f32 %v529, %v582
        %v584 = vpop.f32.mrf.mxu0
        %v585 = vadd.f32 %v529, %v584
        %v586 = vpop.f32.mrf.mxu0
        %v587 = vpop.f32.mrf.mxu0
        %588 = vdwg.mxu0
        %589 = vmatprep.subr.bf16.mxu0 0
        %590 = vmatpush1.bf16.msra.mxu0 0
        %591 = vmatprep.subr.bf16.mxu0 0
        %592 = vmatpush1.bf16.msra.mxu0 0
        %593 = vmatprep.subr.bf16.mxu0 0
        %594 = vmatpush1.bf16.msra.mxu0 0
        %595 = vmatprep.subr.bf16.mxu0 0
        %596 = vmatpush1.bf16.msra.mxu0 0
        %597 = vmatprep.subr.bf16.mxu0 0
        %598 = vmatpush1.bf16.msra.mxu0 0
        %599 = vmatprep.subr.bf16.mxu0 0
        %600 = vmatpush1.bf16.msra.mxu0 0
        %601 = vmatprep.subr.bf16.mxu0 %v546
        %602 = vmatpush1.bf16.msra.mxu0 %v543
        %603 = vmatprep.subr.bf16.mxu0 %v520
        %604 = vmatpush1.bf16.msra.mxu0 %v519
        %605 = vmatprep.subr.bf16.mxu0 0
        %606 = vmatpush2.bf16.msra.mxu0 0
        %607 = vmatprep.subr.bf16.mxu0 0
        %608 = vmatpush2.bf16.msra.mxu0 0
        %609 = vmatprep.subr.bf16.mxu0 0
        %610 = vmatpush2.bf16.msra.mxu0 0
        %611 = vmatprep.subr.bf16.mxu0 0
        %612 = vmatpush2.bf16.msra.mxu0 0
        %613 = vmatprep.subr.bf16.mxu0 0
        %614 = vmatpush2.bf16.msra.mxu0 0
        %615 = vmatprep.subr.bf16.mxu0 0
        %616 = vmatpush2.bf16.msra.mxu0 0
        %617 = vmatprep.subr.bf16.mxu0 0
        %618 = vmatpush2.bf16.msra.mxu0 0
        %619 = vmatprep.subr.bf16.mxu0 0
        %620 = vmatpush2.bf16.msra.mxu0 0
        %621 = vmatprep.mubr.bf16.mxu0 0
        %622 = vmatmul.mubr.bf16.gmra.mxu0 %v533
        %v623 = vpop.f32.mrf.mxu0
        %v624 = vadd.f32 %v529, %v623
        %v625 = vpop.f32.mrf.mxu0
        %v626 = vadd.f32 %v529, %v625
        %v627 = vpop.f32.mrf.mxu0
        %v628 = vpop.f32.mrf.mxu0
        %629 = vdwg.mxu0
        %v630 = vmax.f32 %v583, 0.0
        %v631 = vmax.f32 %v585, 0.0
        %v632 = vmax.f32 %v624, 0.0
        %v633 = vmax.f32 %v626, 0.0
        %v634 = vpack.c.bf16 %v630, %v630
        %v635 = vpack.c.bf16 %v631, %v631
        %v636 = vpack.c.bf16 %v632, %v632
        %v637 = vpack.c.bf16 %v633, %v633
        %v638 = vld [vmem:[%s4] sm:$0xf]
        %v639 = vld [vmem:[%s4 + $0x4] sm:$0xf]
        %v640 = vld [vmem:[%s4 + $0x8] sm:$0xf]
        %v641 = vld [vmem:[%s4 + $0xc] sm:$0xf]
        %643 = vset.pattern.permute.xlu0 0
        %644 = vperm.xlu0 %643, %v310
        %v645 = vpop.permute.xlu0 %644
        %648 = vset.pattern.permute.xlu0 0
        %649 = vperm.xlu0 %648, %v311
        %v650 = vpop.permute.xlu0 %649
        %653 = vset.pattern.permute.xlu0 0
        %654 = vperm.xlu0 %653, %v312
        %v655 = vpop.permute.xlu0 %654
        %658 = vset.pattern.permute.xlu0 0
        %659 = vperm.xlu0 %658, %v313
        %v660 = vpop.permute.xlu0 %659
        %v666 = vunpack.c.l.b16 %v638
        %v667 = vunpack.c.l.b16 %v639
        %v668 = vunpack.c.l.b16 %v640
        %v669 = vunpack.c.l.b16 %v641
        %v670 = vpack.c.b16 %v667, %v666
        %v671 = vpack.c.b16 %v669, %v668
        %vm672 = vcmask 64512
        %v674 = vsel %vm672, %v670, 0
        %v677 = vsel %vm672, %v671, 0
        %v680 = vsel %vm535, %v634, 0
        %v683 = vsel %vm535, %v635, 0
        %v686 = vsel %vm535, %v636, 0
        %v689 = vsel %vm535, %v637, 0
        %691 = vmatprep.subr.bf16.mxu0 0
        %692 = vmatpush1.bf16.msra.mxu0 0
        %693 = vmatprep.subr.bf16.mxu0 0
        %694 = vmatpush1.bf16.msra.mxu0 0
        %695 = vmatprep.subr.bf16.mxu0 0
        %696 = vmatpush1.bf16.msra.mxu0 0
        %697 = vmatprep.subr.bf16.mxu0 0
        %698 = vmatpush1.bf16.msra.mxu0 0
        %699 = vmatprep.subr.bf16.mxu0 0
        %700 = vmatpush1.bf16.msra.mxu0 0
        %701 = vmatprep.subr.bf16.mxu0 0
        %702 = vmatpush1.bf16.msra.mxu0 0
        %703 = vmatprep.subr.bf16.mxu0 0
        %704 = vmatpush1.bf16.msra.mxu0 0
        %705 = vmatprep.subr.bf16.mxu0 %v683
        %706 = vmatpush1.bf16.msra.mxu0 %v680
        %707 = vmatprep.subr.bf16.mxu0 0
        %708 = vmatpush2.bf16.msra.mxu0 0
        %709 = vmatprep.subr.bf16.mxu0 0
        %710 = vmatpush2.bf16.msra.mxu0 0
        %711 = vmatprep.subr.bf16.mxu0 0
        %712 = vmatpush2.bf16.msra.mxu0 0
        %713 = vmatprep.subr.bf16.mxu0 0
        %714 = vmatpush2.bf16.msra.mxu0 0
        %715 = vmatprep.subr.bf16.mxu0 0
        %716 = vmatpush2.bf16.msra.mxu0 0
        %717 = vmatprep.subr.bf16.mxu0 0
        %718 = vmatpush2.bf16.msra.mxu0 0
        %719 = vmatprep.subr.bf16.mxu0 0
        %720 = vmatpush2.bf16.msra.mxu0 0
        %721 = vmatprep.subr.bf16.mxu0 0
        %722 = vmatpush2.bf16.msra.mxu0 0
        %723 = vmatprep.mubr.bf16.mxu0 0
        %724 = vmatmul.mubr.bf16.gmra.mxu0 %v674
        %v725 = vpop.f32.mrf.mxu0
        %v726 = vadd.f32 %v645, %v725
        %v727 = vpop.f32.mrf.mxu0
        %v728 = vadd.f32 %v645, %v727
        %v729 = vpop.f32.mrf.mxu0
        %v730 = vadd.f32 %v650, %v729
        %v731 = vpop.f32.mrf.mxu0
        %v732 = vadd.f32 %v650, %v731
        %733 = vmatprep.mubr.bf16.mxu0 0
        %734 = vmatmul.mubr.bf16.gmra.mxu0 %v677
        %v735 = vpop.f32.mrf.mxu0
        %v736 = vadd.f32 %v655, %v735
        %v737 = vpop.f32.mrf.mxu0
        %v738 = vadd.f32 %v655, %v737
        %v739 = vpop.f32.mrf.mxu0
        %v740 = vadd.f32 %v660, %v739
        %v741 = vpop.f32.mrf.mxu0
        %v742 = vadd.f32 %v660, %v741
        %743 = vdwg.mxu0
        %744 = vmatprep.subr.bf16.mxu0 0
        %745 = vmatpush1.bf16.msra.mxu0 0
        %746 = vmatprep.subr.bf16.mxu0 0
        %747 = vmatpush1.bf16.msra.mxu0 0
        %748 = vmatprep.subr.bf16.mxu0 0
        %749 = vmatpush1.bf16.msra.mxu0 0
        %750 = vmatprep.subr.bf16.mxu0 0
        %751 = vmatpush1.bf16.msra.mxu0 0
        %752 = vmatprep.subr.bf16.mxu0 0
        %753 = vmatpush1.bf16.msra.mxu0 0
        %754 = vmatprep.subr.bf16.mxu0 0
        %755 = vmatpush1.bf16.msra.mxu0 0
        %756 = vmatprep.subr.bf16.mxu0 0
        %757 = vmatpush1.bf16.msra.mxu0 0
        %758 = vmatprep.subr.bf16.mxu0 %v689
        %759 = vmatpush1.bf16.msra.mxu0 %v686
        %760 = vmatprep.subr.bf16.mxu0 0
        %761 = vmatpush2.bf16.msra.mxu0 0
        %762 = vmatprep.subr.bf16.mxu0 0
        %763 = vmatpush2.bf16.msra.mxu0 0
        %764 = vmatprep.subr.bf16.mxu0 0
        %765 = vmatpush2.bf16.msra.mxu0 0
        %766 = vmatprep.subr.bf16.mxu0 0
        %767 = vmatpush2.bf16.msra.mxu0 0
        %768 = vmatprep.subr.bf16.mxu0 0
        %769 = vmatpush2.bf16.msra.mxu0 0
        %770 = vmatprep.subr.bf16.mxu0 0
        %771 = vmatpush2.bf16.msra.mxu0 0
        %772 = vmatprep.subr.bf16.mxu0 0
        %773 = vmatpush2.bf16.msra.mxu0 0
        %774 = vmatprep.subr.bf16.mxu0 0
        %775 = vmatpush2.bf16.msra.mxu0 0
        %776 = vmatprep.mubr.bf16.mxu0 0
        %777 = vmatmul.mubr.bf16.gmra.mxu0 %v674
        %v778 = vpop.f32.mrf.mxu0
        %v779 = vadd.f32 %v645, %v778
        %v780 = vpop.f32.mrf.mxu0
        %v781 = vadd.f32 %v645, %v780
        %v782 = vpop.f32.mrf.mxu0
        %v783 = vadd.f32 %v650, %v782
        %v784 = vpop.f32.mrf.mxu0
        %v785 = vadd.f32 %v650, %v784
        %786 = vmatprep.mubr.bf16.mxu0 0
        %787 = vmatmul.mubr.bf16.gmra.mxu0 %v677
        %v788 = vpop.f32.mrf.mxu0
        %v789 = vadd.f32 %v655, %v788
        %v790 = vpop.f32.mrf.mxu0
        %v791 = vadd.f32 %v655, %v790
        %v792 = vpop.f32.mrf.mxu0
        %v793 = vadd.f32 %v660, %v792
        %v794 = vpop.f32.mrf.mxu0
        %v795 = vadd.f32 %v660, %v794
        %796 = vdwg.mxu0
        %v797 = vunpack.c.l.bf16 %v314
        %v798 = vunpack.c.h.bf16 %v314
        %v799 = vunpack.c.l.bf16 %v315
        %v800 = vunpack.c.h.bf16 %v315
        %v801 = vunpack.c.l.bf16 %v316
        %v802 = vunpack.c.h.bf16 %v316
        %v803 = vunpack.c.l.bf16 %v317
        %v804 = vunpack.c.h.bf16 %v317
        %v805 = vunpack.c.l.bf16 %v318
        %v806 = vunpack.c.h.bf16 %v318
        %v807 = vunpack.c.l.bf16 %v319
        %v808 = vunpack.c.h.bf16 %v319
        %v809 = vunpack.c.l.bf16 %v320
        %v810 = vunpack.c.h.bf16 %v320
        %v811 = vunpack.c.l.bf16 %v321
        %v812 = vunpack.c.h.bf16 %v321
        %v813 = vadd.f32 %v726, %v797
        %v814 = vadd.f32 %v728, %v798
        %v815 = vadd.f32 %v779, %v799
        %v816 = vadd.f32 %v781, %v800
        %v817 = vadd.f32 %v730, %v801
        %v818 = vadd.f32 %v732, %v802
        %v819 = vadd.f32 %v783, %v803
        %v820 = vadd.f32 %v785, %v804
        %v821 = vadd.f32 %v736, %v805
        %v822 = vadd.f32 %v738, %v806
        %v823 = vadd.f32 %v789, %v807
        %v824 = vadd.f32 %v791, %v808
        %v825 = vadd.f32 %v740, %v809
        %v826 = vadd.f32 %v742, %v810
        %v827 = vadd.f32 %v793, %v811
        %v828 = vadd.f32 %v795, %v812
        %v829 = vmax.f32 %v813, 0.0
        %v830 = vmax.f32 %v814, 0.0
        %v831 = vmax.f32 %v815, 0.0
        %v832 = vmax.f32 %v816, 0.0
        %v833 = vmax.f32 %v817, 0.0
        %v834 = vmax.f32 %v818, 0.0
        %v835 = vmax.f32 %v819, 0.0
        %v836 = vmax.f32 %v820, 0.0
        %v837 = vmax.f32 %v821, 0.0
        %v838 = vmax.f32 %v822, 0.0
        %v839 = vmax.f32 %v823, 0.0
        %v840 = vmax.f32 %v824, 0.0
        %v841 = vmax.f32 %v825, 0.0
        %v842 = vmax.f32 %v826, 0.0
        %v843 = vmax.f32 %v827, 0.0
        %v844 = vmax.f32 %v828, 0.0
        %v845 = vpack.c.bf16 %v833, %v829
        %v846 = vpack.c.bf16 %v834, %v830
        %v847 = vpack.c.bf16 %v835, %v831
        %v848 = vpack.c.bf16 %v836, %v832
        %v849 = vpack.c.bf16 %v841, %v837
        %v850 = vpack.c.bf16 %v842, %v838
        %v851 = vpack.c.bf16 %v843, %v839
        %v852 = vpack.c.bf16 %v844, %v840
        %v861 = vunpack.c.l.b16 %v845
        %v862 = vunpack.c.l.b16 %v846
        %v863 = vunpack.c.l.b16 %v847
        %v864 = vunpack.c.l.b16 %v848
        %v865 = vunpack.c.h.b16 %v845
        %v866 = vunpack.c.h.b16 %v846
        %v867 = vunpack.c.h.b16 %v847
        %v868 = vunpack.c.h.b16 %v848
        %v869 = vunpack.c.l.b16 %v849
        %v870 = vunpack.c.l.b16 %v850
        %v871 = vunpack.c.l.b16 %v851
        %v872 = vunpack.c.l.b16 %v852
        %v873 = vunpack.c.h.b16 %v849
        %v874 = vunpack.c.h.b16 %v850
        %v875 = vunpack.c.h.b16 %v851
        %v876 = vunpack.c.h.b16 %v852
        %v877 = vpack.c.b16 %v862, %v861
        %v878 = vpack.c.b16 %v864, %v863
        %v879 = vpack.c.b16 %v866, %v865
        %v880 = vpack.c.b16 %v868, %v867
        %v881 = vpack.c.b16 %v870, %v869
        %v882 = vpack.c.b16 %v872, %v871
        %v883 = vpack.c.b16 %v874, %v873
        %v884 = vpack.c.b16 %v876, %v875
        %893 = vst [vmem:[%s300] sm:$0xff] %v877
        %894 = vst [vmem:[%s300 + $0x8] sm:$0xff] %v878
        %895 = vst [vmem:[%s300 + $0x10] sm:$0xff] %v879
        %896 = vst [vmem:[%s300 + $0x18] sm:$0xff] %v880
        %897 = vst [vmem:[%s300 + $0x20] sm:$0xff] %v881
        %898 = vst [vmem:[%s300 + $0x28] sm:$0xff] %v882
        %899 = vst [vmem:[%s300 + $0x30] sm:$0xff] %v883
        %900 = vst [vmem:[%s300 + $0x38] sm:$0xff] %v884
        %s901 = sand.u32 %s183, 1
        %s902 = scalar_lea.sflag [#allocation4], %s901
        %s903 = sand.u32 %s183, 1
        %s904 = smul.addr %s903, 64
        %s905 = scalar_lea.vmem [#allocation5], %s904
        // Predicated region
        $region49: #{tpu_custom_call.1} parent=43 // pred_check
          %p906 = pneg %p193
        $region50: #{tpu_custom_call.1} parent=43 // pred_check_branch
          %908 = sbr.rel (%p906) target = $region52
        $region51: #{tpu_custom_call.1} parent=43 // pred_region
          %s909 = smul.u32 4, %s28
          %s911 = ssub.s32 1024, 1024
          %912 = vsyncadd %s902, %s911
          %s913 = smul.addr %s27, 16
          %s914 = sadd.s32 %s909, %s913
          %s915 = smul.addr %s914, 64
          %s916 = scalar_lea.hbm %s6, %s915
          %s917 = sshll.u32 %s905, 4
          %s918 = int_to_ptr.vmem [resolvable:$true] %s917
          %923 = dma.vmem_to_hbm [thread:$0]  %s918, 1024, %s916, %s902, 256, 256, 16
        $region52: #{tpu_custom_call.1} parent=43 // pred_fallthru
          _
      $region44: #{tpu_custom_call.1} parent=5 // pred_fallthru
        _
      %p924 = scmp.le.s32.totalorder 2, %s18
      // Predicated region
      $region53: #{tpu_custom_call.1} parent=5 // pred_check
        %p925 = pneg %p924
      $region54: #{tpu_custom_call.1} parent=5 // pred_check_branch
        %927 = sbr.rel (%p925) target = $region56
      $region55: #{tpu_custom_call.1} parent=5 // pred_region
        %s928 = ssub.s32 %s18, 2
        // Predicated region
        $region57: #{tpu_custom_call.1} parent=55 // pred_check
          %p929 = pneg %p199
        $region58: #{tpu_custom_call.1} parent=55 // pred_check_branch
          %931 = sbr.rel (%p929) target = $region60
        $region59: #{tpu_custom_call.1} parent=55 // pred_region
          %s932 = sand.u32 %s184, 1
          %s933 = scalar_lea.sflag [#allocation4], %s932
          %s934 = sand.u32 %s184, 1
          %s935 = smul.addr %s934, 64
          %s936 = scalar_lea.vmem [#allocation5], %s935
          %937 = dma.done %s933, 1024
        $region60: #{tpu_custom_call.1} parent=55 // pred_fallthru
          _
      $region56: #{tpu_custom_call.1} parent=5 // pred_fallthru
        _
    $region6: #{tpu_custom_call.1} parent=1 // loop_footer
      %s22 = sadd.s32 1, %s18
    $region7: #{tpu_custom_call.1} parent=1 // loop_footer_branch
      %17 = sbr.rel target = $region3
    $region8: #{tpu_custom_call.1} parent=1 // loop_exit
      _
    %938 = vsyncpa [#allocation3], 1
    %s939 = scalar_lea.sflag [#allocation3], 1
    %940 = vsyncpa %s939, 1
    %941 = vsyncpa [#allocation4], 1
    %s942 = scalar_lea.sflag [#allocation4], 1
    %943 = vsyncpa %s942, 1

</llo_original>
